<compile_context>
chip_gen: v5e
topology: v5e:2x2
jax: 0.10.0
libtpu: 0.0.40
codegen_flags: <defaults>
</compile_context>

<pallas_src>
import jax
import jax.numpy as jnp
from jax.experimental import pallas as pl
from jax.experimental.pallas import tpu as pltpu


def _fused_kernel(x_ref, w12_ref, w3t_ref, o_ref):
    # x_ref:   (B, M, N)   input in original (un-permuted) layout
    # w12_ref: (2P, M)     [W1; W2] stacked along out_features
    # w3t_ref: (N, Q)      W3.T (pre-transposed in the wrapper)
    # o_ref:   (B, P, Q)
    B, M, N = x_ref.shape
    two_p = w12_ref.shape[0]
    P = two_p // 2

    w12 = w12_ref[...]            # (2P, M)
    w3t = w3t_ref[...]            # (N, Q)

    for b in range(B):            # B is tiny & static -> fully unrolled
        xb = x_ref[b]             # (M, N)

        # y12 = W12 @ x[b], contraction dim M == 2 unrolled on the VPU.
        y12 = w12[:, 0:1] * xb[0:1, :]                      # (2P, N)
        for m in range(1, M):
            y12 = y12 + w12[:, m:m + 1] * xb[m:m + 1, :]

        # maximum of the two fused linears:  max(W1 @ x, W2 @ x)
        h = jnp.maximum(y12[:P, :], y12[P:, :])             # (P, N)

        # out_b = h @ W3.T == h @ w3t, contraction dim N == 2 unrolled on the VPU.
        out_b = h[:, 0:1] * w3t[0:1, :]                     # (P, Q)
        for n in range(1, N):
            out_b = out_b + h[:, n:n + 1] * w3t[n:n + 1, :]

        o_ref[b] = out_b.astype(o_ref.dtype)


def fused_permute_linear(x, w1, w2, w3):
    B, M, N = x.shape
    P = w1.shape[0]   # out_features of linear1 / linear2 (applied over M)
    Q = w3.shape[0]   # out_features of linear3 (applied over N)

    # Weight prep done once in the wrapper (not per kernel step):
    w12 = jnp.concatenate([w1, w2], axis=0)   # (2P, M)
    w3t = w3.T                                # (N, Q)

    return pl.pallas_call(
        _fused_kernel,
        out_shape=jax.ShapeDtypeStruct((B, P, Q), x.dtype),
        # No grid: single invocation, all operands resident in VMEM.
        in_specs=[
            pl.BlockSpec(memory_space=pltpu.MemorySpace.VMEM),
            pl.BlockSpec(memory_space=pltpu.MemorySpace.VMEM),
            pl.BlockSpec(memory_space=pltpu.MemorySpace.VMEM),
        ],
        out_specs=pl.BlockSpec(memory_space=pltpu.MemorySpace.VMEM),
    )(x, w12, w3t)


def reference(x, w1, w2, w3):
    x2 = jnp.transpose(x, (0, 2, 1))
    x3 = x2 @ w1.T
    x4 = x2 @ w2.T
    x5 = jnp.maximum(x4, x3)
    x6 = jnp.transpose(x5, (0, 2, 1))
    return x6 @ w3.T


if __name__ == "__main__":
    key = jax.random.PRNGKey(0)
    kx, k1, k2, k3 = jax.random.split(key, 4)

    B, M, N = 2, 2, 2   # module fixes in_features = 2 for all linears
    x = jax.random.normal(kx, (B, M, N), dtype=jnp.float32)

    # nn.Linear-style deterministic init: U(-1/sqrt(in), 1/sqrt(in)), in = 2
    bound = 1.0 / jnp.sqrt(2.0)
    w1 = jax.random.uniform(k1, (2, 2), jnp.float32, -bound, bound)  # linear1.weight (bias unused in fwd)
    w2 = jax.random.uniform(k2, (2, 2), jnp.float32, -bound, bound)  # linear2.weight
    w3 = jax.random.uniform(k3, (2, 2), jnp.float32, -bound, bound)  # linear3.weight

    out = fused_permute_linear(x, w1, w2, w3)
    jax.block_until_ready(out)

    ref = reference(x, w1, w2, w3)
    assert out.shape == (B, 2, 2)
    assert jnp.allclose(out, ref, atol=1e-5, rtol=1e-5), "mismatch vs reference"

    print("KERNEL_OK")
</pallas_src>

<mosaic_0001>
module attributes {stable_mosaic.version = 11 : i64} {
  func.func @_fused_kernel(%arg0: memref<2x2x2xf32, #tpu.memory_space<vmem>>, %arg1: memref<4x2xf32, #tpu.memory_space<vmem>>, %arg2: memref<2x2xf32, #tpu.memory_space<vmem>>, %arg3: memref<2x2x2xf32, #tpu.memory_space<vmem>>) attributes {dimension_semantics = [], scalar_prefetch = 0 : i64, scratch_operands = 0 : i64, tpu.core_type = #tpu.core_type<tc>} {
    %c0 = arith.constant 0 : index
    %c0_0 = arith.constant 0 : index
    %0 = vector.load %arg1[%c0, %c0_0] : memref<4x2xf32, #tpu.memory_space<vmem>>, vector<4x2xf32>
    %c0_1 = arith.constant 0 : index
    %c0_2 = arith.constant 0 : index
    %1 = vector.load %arg2[%c0_1, %c0_2] : memref<2x2xf32, #tpu.memory_space<vmem>>, vector<2x2xf32>
    %c0_3 = arith.constant 0 : index
    %c0_4 = arith.constant 0 : index
    %c0_5 = arith.constant 0 : index
    %2 = vector.load %arg0[%c0_3, %c0_4, %c0_5] : memref<2x2x2xf32, #tpu.memory_space<vmem>>, vector<1x2x2xf32>
    %3 = vector.shape_cast %2 : vector<1x2x2xf32> to vector<2x2xf32>
    %4 = vector.extract_strided_slice %0 {offsets = [0, 0], sizes = [4, 1], strides = [1, 1]} : vector<4x2xf32> to vector<4x1xf32>
    %5 = vector.extract_strided_slice %3 {offsets = [0, 0], sizes = [1, 2], strides = [1, 1]} : vector<2x2xf32> to vector<1x2xf32>
    %6 = vector.broadcast %4 : vector<4x1xf32> to vector<4x2xf32>
    %7 = vector.broadcast %5 : vector<1x2xf32> to vector<4x2xf32>
    %8 = arith.mulf %6, %7 : vector<4x2xf32>
    %9 = vector.extract_strided_slice %0 {offsets = [0, 1], sizes = [4, 1], strides = [1, 1]} : vector<4x2xf32> to vector<4x1xf32>
    %10 = vector.extract_strided_slice %3 {offsets = [1, 0], sizes = [1, 2], strides = [1, 1]} : vector<2x2xf32> to vector<1x2xf32>
    %11 = vector.broadcast %9 : vector<4x1xf32> to vector<4x2xf32>
    %12 = vector.broadcast %10 : vector<1x2xf32> to vector<4x2xf32>
    %13 = arith.mulf %11, %12 : vector<4x2xf32>
    %14 = arith.addf %8, %13 : vector<4x2xf32>
    %15 = vector.extract_strided_slice %14 {offsets = [0, 0], sizes = [2, 2], strides = [1, 1]} : vector<4x2xf32> to vector<2x2xf32>
    %16 = vector.extract_strided_slice %14 {offsets = [2, 0], sizes = [2, 2], strides = [1, 1]} : vector<4x2xf32> to vector<2x2xf32>
    %17 = arith.maximumf %15, %16 : vector<2x2xf32>
    %18 = vector.extract_strided_slice %17 {offsets = [0, 0], sizes = [2, 1], strides = [1, 1]} : vector<2x2xf32> to vector<2x1xf32>
    %19 = vector.extract_strided_slice %1 {offsets = [0, 0], sizes = [1, 2], strides = [1, 1]} : vector<2x2xf32> to vector<1x2xf32>
    %20 = vector.broadcast %18 : vector<2x1xf32> to vector<2x2xf32>
    %21 = vector.broadcast %19 : vector<1x2xf32> to vector<2x2xf32>
    %22 = arith.mulf %20, %21 : vector<2x2xf32>
    %23 = vector.extract_strided_slice %17 {offsets = [0, 1], sizes = [2, 1], strides = [1, 1]} : vector<2x2xf32> to vector<2x1xf32>
    %24 = vector.extract_strided_slice %1 {offsets = [1, 0], sizes = [1, 2], strides = [1, 1]} : vector<2x2xf32> to vector<1x2xf32>
    %25 = vector.broadcast %23 : vector<2x1xf32> to vector<2x2xf32>
    %26 = vector.broadcast %24 : vector<1x2xf32> to vector<2x2xf32>
    %27 = arith.mulf %25, %26 : vector<2x2xf32>
    %28 = arith.addf %22, %27 : vector<2x2xf32>
    %c0_6 = arith.constant 0 : index
    %c0_7 = arith.constant 0 : index
    %c0_8 = arith.constant 0 : index
    %29 = vector.load %arg3[%c0_6, %c0_7, %c0_8] : memref<2x2x2xf32, #tpu.memory_space<vmem>>, vector<1x2x2xf32>
    %30 = vector.shape_cast %29 : vector<1x2x2xf32> to vector<2x2xf32>
    %31 = vector.shape_cast %28 : vector<2x2xf32> to vector<1x2x2xf32>
    tpu.vector_store %arg3[%c0_6, %c0_7, %c0_8], %31 {strides = array<i32>} : memref<2x2x2xf32, #tpu.memory_space<vmem>>, vector<1x2x2xf32>,
    %c1 = arith.constant 1 : index
    %c0_9 = arith.constant 0 : index
    %c0_10 = arith.constant 0 : index
    %32 = vector.load %arg0[%c1, %c0_9, %c0_10] : memref<2x2x2xf32, #tpu.memory_space<vmem>>, vector<1x2x2xf32>
    %33 = vector.shape_cast %32 : vector<1x2x2xf32> to vector<2x2xf32>
    %34 = vector.extract_strided_slice %0 {offsets = [0, 0], sizes = [4, 1], strides = [1, 1]} : vector<4x2xf32> to vector<4x1xf32>
    %35 = vector.extract_strided_slice %33 {offsets = [0, 0], sizes = [1, 2], strides = [1, 1]} : vector<2x2xf32> to vector<1x2xf32>
    %36 = vector.broadcast %34 : vector<4x1xf32> to vector<4x2xf32>
    %37 = vector.broadcast %35 : vector<1x2xf32> to vector<4x2xf32>
    %38 = arith.mulf %36, %37 : vector<4x2xf32>
    %39 = vector.extract_strided_slice %0 {offsets = [0, 1], sizes = [4, 1], strides = [1, 1]} : vector<4x2xf32> to vector<4x1xf32>
    %40 = vector.extract_strided_slice %33 {offsets = [1, 0], sizes = [1, 2], strides = [1, 1]} : vector<2x2xf32> to vector<1x2xf32>
    %41 = vector.broadcast %39 : vector<4x1xf32> to vector<4x2xf32>
    %42 = vector.broadcast %40 : vector<1x2xf32> to vector<4x2xf32>
    %43 = arith.mulf %41, %42 : vector<4x2xf32>
    %44 = arith.addf %38, %43 : vector<4x2xf32>
    %45 = vector.extract_strided_slice %44 {offsets = [0, 0], sizes = [2, 2], strides = [1, 1]} : vector<4x2xf32> to vector<2x2xf32>
    %46 = vector.extract_strided_slice %44 {offsets = [2, 0], sizes = [2, 2], strides = [1, 1]} : vector<4x2xf32> to vector<2x2xf32>
    %47 = arith.maximumf %45, %46 : vector<2x2xf32>
    %48 = vector.extract_strided_slice %47 {offsets = [0, 0], sizes = [2, 1], strides = [1, 1]} : vector<2x2xf32> to vector<2x1xf32>
    %49 = vector.extract_strided_slice %1 {offsets = [0, 0], sizes = [1, 2], strides = [1, 1]} : vector<2x2xf32> to vector<1x2xf32>
    %50 = vector.broadcast %48 : vector<2x1xf32> to vector<2x2xf32>
    %51 = vector.broadcast %49 : vector<1x2xf32> to vector<2x2xf32>
    %52 = arith.mulf %50, %51 : vector<2x2xf32>
    %53 = vector.extract_strided_slice %47 {offsets = [0, 1], sizes = [2, 1], strides = [1, 1]} : vector<2x2xf32> to vector<2x1xf32>
    %54 = vector.extract_strided_slice %1 {offsets = [1, 0], sizes = [1, 2], strides = [1, 1]} : vector<2x2xf32> to vector<1x2xf32>
    %55 = vector.broadcast %53 : vector<2x1xf32> to vector<2x2xf32>
    %56 = vector.broadcast %54 : vector<1x2xf32> to vector<2x2xf32>
    %57 = arith.mulf %55, %56 : vector<2x2xf32>
    %58 = arith.addf %52, %57 : vector<2x2xf32>
    %c1_11 = arith.constant 1 : index
    %c0_12 = arith.constant 0 : index
    %c0_13 = arith.constant 0 : index
    %59 = vector.load %arg3[%c1_11, %c0_12, %c0_13] : memref<2x2x2xf32, #tpu.memory_space<vmem>>, vector<1x2x2xf32>
    %60 = vector.shape_cast %59 : vector<1x2x2xf32> to vector<2x2xf32>
    %61 = vector.shape_cast %58 : vector<2x2xf32> to vector<1x2x2xf32>
    tpu.vector_store %arg3[%c1_11, %c0_12, %c0_13], %61 {strides = array<i32>} : memref<2x2x2xf32, #tpu.memory_space<vmem>>, vector<1x2x2xf32>,
    return
  }
}

</mosaic_0001>

<llo_original>
// kernel: tpu_custom_call.1
$region0: #{tpu_custom_call.1}
  #allocation0 [shape = 'u32[]', space=smem, size = 0x4, offset = 0x4, fixed_abs, tag = 'smem constant byte address 0x4 - core index']
  #allocation1 [shape = 'u32[72,128]{1,0:T(1,128)}', space=vmem, size = 0x9000, scoped, tag = 'internal scratch']
  %s0 = inlined_call_operand.vmem [shape: f32[2,2,2], index: 0, kind: input, shape index: {}]
  %s1 = inlined_call_operand.vmem [shape: f32[4,2], index: 1, kind: input, shape index: {}]
  %s2 = inlined_call_operand.vmem [shape: f32[2,2], index: 2, kind: input, shape index: {}]
  %s3 = inlined_call_operand.hbm [shape: f32[2,2,2], index: 3, kind: output, shape index: {}]
  %s4 = sld [smem:[#allocation0]]
  $region22: #{tpu_custom_call.1} parent=0
    _
  %s6 = ssub.s32 1, %s4
  %s7 = scalar_select 0, %s6, %s4
  $region1: #{tpu_custom_call.1} parent=0
    #allocation2 [shape = 'u8[2048]{0}', space=vmem, size = 0x800, scoped, tag = 'output window, operand 0, single buffered']
    #allocation3 [shape = 's32[1]{0}', space=sflag, size = 0x4, scoped, tag = 'scoped memory for tpu_custom_call.1']
    %8 = vsyncpa [#allocation3], 0
    // Predicated region
    $region2: #{tpu_custom_call.1} parent=1 // pred_check
      _
    $region3: #{tpu_custom_call.1} parent=1 // pred_check_branch
      %10 = sbr.rel (0) target = $region5
    $region4: #{tpu_custom_call.1} parent=1 // pred_region
      _
    $region5: #{tpu_custom_call.1} parent=1 // pred_fallthru
      _
    // Predicated region
    $region6: #{tpu_custom_call.1} parent=1 // pred_check
      _
    $region7: #{tpu_custom_call.1} parent=1 // pred_check_branch
      %12 = sbr.rel (0) target = $region9
    $region8: #{tpu_custom_call.1} parent=1 // pred_region
      _
    $region9: #{tpu_custom_call.1} parent=1 // pred_fallthru
      _
    // Predicated region
    $region10: #{tpu_custom_call.1} parent=1 // pred_check
      _
    $region11: #{tpu_custom_call.1} parent=1 // pred_check_branch
      %14 = sbr.rel (0) target = $region13
    $region12: #{tpu_custom_call.1} parent=1 // pred_region
      _
    $region13: #{tpu_custom_call.1} parent=1 // pred_fallthru
      _
    %v15 = vld [vmem:[%s1] sm:$0xf]
    %v16 = vld [vmem:[%s2] sm:$0x3]
    %v17 = vld [vmem:[%s0] sm:$0x3]
    %19 = vset.pattern.permute.xlu0 0
    %20 = vperm.xlu0 %19, %v15
    %v21 = vpop.permute.xlu0 %20
    %v23 = vperm.slane %v17, 0
    %v24 = vmul.f32 %v21, %v23
    %25 = vset.pattern.permute.xlu0 1
    %26 = vperm.xlu0 %25, %v15
    %v27 = vpop.permute.xlu0 %26
    %v29 = vperm.slane %v17, 1
    %v30 = vmul.f32 %v27, %v29
    %v31 = vadd.f32 %v24, %v30
    %v33 = vrot.slane %v31, 2
    %v35 = vmax.f32 %v31, %v33
    %37 = vset.pattern.permute.xlu0 0
    %38 = vperm.xlu0 %37, %v35
    %v39 = vpop.permute.xlu0 %38
    %v41 = vperm.slane %v16, 0
    %v42 = vmul.f32 %v39, %v41
    %43 = vset.pattern.permute.xlu0 1
    %44 = vperm.xlu0 %43, %v35
    %v45 = vpop.permute.xlu0 %44
    %v47 = vperm.slane %v16, 1
    %v48 = vmul.f32 %v45, %v47
    %v49 = vadd.f32 %v42, %v48
    %vm50 = vcmask 9216
    %51 = vst.msk [vmem:[#allocation2] sm:$0x3] %vm50, %v49
    %s52 = scalar_lea.vmem %s0, 2
    %v53 = vld [vmem:[%s52] sm:$0x3]
    %v54 = vperm.slane %v53, 0
    %v55 = vmul.f32 %v21, %v54
    %v56 = vperm.slane %v53, 1
    %v57 = vmul.f32 %v27, %v56
    %v58 = vadd.f32 %v55, %v57
    %v60 = vrot.slane %v58, 2
    %v62 = vmax.f32 %v58, %v60
    %64 = vset.pattern.permute.xlu0 0
    %65 = vperm.xlu0 %64, %v62
    %v66 = vpop.permute.xlu0 %65
    %v68 = vmul.f32 %v66, %v41
    %69 = vset.pattern.permute.xlu0 1
    %70 = vperm.xlu0 %69, %v62
    %v71 = vpop.permute.xlu0 %70
    %v73 = vmul.f32 %v71, %v47
    %v74 = vadd.f32 %v68, %v73
    %s75 = scalar_lea.vmem [#allocation2], 2
    %76 = vst.msk [vmem:[%s75] sm:$0x3] %vm50, %v74
    // Predicated region
    $region14: #{tpu_custom_call.1} parent=1 // pred_check
      _
    $region15: #{tpu_custom_call.1} parent=1 // pred_check_branch
      %78 = sbr.rel (0) target = $region17
    $region16: #{tpu_custom_call.1} parent=1 // pred_region
      %80 = vsyncadd [#allocation3], 0
      %s81 = sshll.u32 [#allocation2], 4
      %s82 = int_to_ptr.vmem [resolvable:$true] %s81
      %s83 = sshll.u32 %s3, 4
      %s84 = int_to_ptr.hbm [resolvable:$true] %s83
      %89 = dma.vmem_to_hbm [thread:$0]  %s82, 64, %s84, [#allocation3], 32, 32, 2
    $region17: #{tpu_custom_call.1} parent=1 // pred_fallthru
      _
    // Predicated region
    $region18: #{tpu_custom_call.1} parent=1 // pred_check
      _
    $region19: #{tpu_custom_call.1} parent=1 // pred_check_branch
      %91 = sbr.rel (0) target = $region21
    $region20: #{tpu_custom_call.1} parent=1 // pred_region
      %93 = dma.done [#allocation3], 64
    $region21: #{tpu_custom_call.1} parent=1 // pred_fallthru
      _
    %94 = vsyncpa [#allocation3], 1

</llo_original>
